<compile_context>
chip_gen: v7x
topology: tpu7x:2x2x1
jax: 0.10.0
libtpu: 0.0.40
codegen_flags: <defaults>
</compile_context>

<pallas_src>
import functools

import jax
import jax.numpy as jnp
from jax.experimental import pallas as pl
from jax.experimental.pallas import tpu as pltpu


def se_kernel(x_ref, w1_ref, b1_ref, w2_ref, b2_ref, o_ref, *, inv_hw, bt):
    # x_ref block: (bt, C, HW).
    # Global average pool per batch element: a lane reduction keeps channel on
    # sublanes; the (C, 1) columns are concatenated into a (C, bt) block so the
    # FC path runs once per grid step instead of once per batch element.
    cols = [jnp.sum(x_ref[b].astype(jnp.float32), axis=-1, keepdims=True)
            for b in range(bt)]
    pooled = (cols[0] if bt == 1 else jnp.concatenate(cols, axis=1)) * inv_hw  # (C, bt)

    # fc1 + ReLU: (hidden, C) @ (C, bt) -> (hidden, bt); channel stays on sublanes.
    h = jnp.dot(w1_ref[...], pooled, preferred_element_type=jnp.float32) + b1_ref[...]
    h = jnp.maximum(h, 0.0)

    # fc2 + Sigmoid: (C, hidden) @ (hidden, bt) -> (C, bt).
    z = jnp.dot(w2_ref[...], h, preferred_element_type=jnp.float32) + b2_ref[...]
    # exp and the approximate reciprocal both run on the EUP slot (idle otherwise).
    s = pl.reciprocal(1.0 + jnp.exp(-z), approx=True)                          # (C, bt)

    # Channel-wise rescale: each (C, 1) column broadcasts over lanes directly.
    for b in range(bt):
        o_ref[b] = (x_ref[b] * s[:, b:b + 1]).astype(o_ref.dtype)


def _chip_config():
    """(vmem_limit_bytes, num_tensorcores) for the local TPU generation."""
    kind = ""
    try:
        kind = jax.devices()[0].device_kind.lower()
    except Exception:
        pass
    is_v7 = "v7" in kind
    vmem_phys = None
    try:
        vmem_phys = int(pltpu.get_tpu_info().vmem_capacity_bytes)
    except Exception:
        vmem_phys = None
    if vmem_phys is None:
        vmem_phys = (64 if is_v7 else 128) * 1024 * 1024
    vmem_limit = min(int(0.75 * vmem_phys), 96 * 1024 * 1024)
    num_tc = 2 if is_v7 else 1
    return vmem_limit, num_tc


def _choose_batch_tile(B, per_batch_bytes, block_budget, num_tc, bt_cap=64):
    """Largest batch tile whose double-buffered in+out slabs fit the budget.

    On 2-TC chips (v7x) prefer an even grid-step count so both TensorCores
    stay busy; on single-TC chips just take the biggest tile that fits.
    bt_cap bounds the statically-unrolled kernel body."""
    bt_max = max(1, min(B, bt_cap, block_budget // max(per_batch_bytes, 1)))
    if num_tc >= 2 and B >= 2:
        bt_max = max(1, min(bt_max, B // 2))
        for bt in range(bt_max, 0, -1):
            if B % bt == 0 and (B // bt) % 2 == 0:
                return bt
    for bt in range(bt_max, 0, -1):
        if B % bt == 0:
            return bt
    return 1


def se_layer(x, w1, b1, w2, b2):
    """SELayer forward.

    x : (B, C, H, W)            float32 or bfloat16
    w1: (hidden, C)  fc1 weight (PyTorch (out, in) layout), b1: (hidden,)
    w2: (C, hidden)  fc2 weight (PyTorch (out, in) layout), b2: (C,)
    """
    B, C, H, W = x.shape
    HW = H * W
    hidden = w1.shape[0]
    itemsize = x.dtype.itemsize

    # Collapsing (H, W) -> HW is a free reshape (contiguous minor dims).
    x_flat = x.reshape(B, C, HW)

    # Biases as (out, 1) columns: they broadcast against the (out, bt) dots.
    b1c = b1.reshape(hidden, 1).astype(jnp.float32)
    b2c = b2.reshape(C, 1).astype(jnp.float32)

    vmem_limit, num_tc = _chip_config()
    weight_bytes = (hidden * C + hidden + C * hidden + C) * 4
    per_batch = 4 * C * HW * itemsize          # 2 bufs x (in + out) per element

    # Guard: at least a single-batch slab (plus weights + margin) must fit.
    min_required = per_batch + 2 * weight_bytes + (1 << 20)
    if min_required > vmem_limit:
        # TODO(synk): for very large C*H*W, split HW across an accumulation
        # grid axis (pool pass + rescale pass) instead of raising the limit.
        vmem_limit = min_required

    block_budget = max(int(0.7 * vmem_limit) - 2 * weight_bytes, per_batch)
    bt = _choose_batch_tile(B, per_batch, block_budget, num_tc)
    grid = (B // bt,)

    kernel = functools.partial(se_kernel, inv_hw=1.0 / HW, bt=bt)

    cost = pl.CostEstimate(
        flops=2 * B * C * HW + 4 * B * C * hidden,
        transcendentals=B * C,
        bytes_accessed=2 * B * C * HW * itemsize + weight_bytes,
    )

    out = pl.pallas_call(
        kernel,
        out_shape=jax.ShapeDtypeStruct((B, C, HW), x.dtype),
        grid_spec=pltpu.PrefetchScalarGridSpec(
            num_scalar_prefetch=0,
            grid=grid,
            in_specs=[
                pl.BlockSpec((bt, C, HW), lambda b: (b, 0, 0)),
                pl.BlockSpec((hidden, C), lambda b: (0, 0)),
                pl.BlockSpec((hidden, 1), lambda b: (0, 0)),
                pl.BlockSpec((C, hidden), lambda b: (0, 0)),
                pl.BlockSpec((C, 1), lambda b: (0, 0)),
            ],
            out_specs=pl.BlockSpec((bt, C, HW), lambda b: (b, 0, 0)),
        ),
        compiler_params=pltpu.CompilerParams(
            dimension_semantics=("parallel",),
            vmem_limit_bytes=int(vmem_limit),
        ),
        cost_estimate=cost,
    )(x_flat, w1.astype(jnp.float32), b1c, w2.astype(jnp.float32), b2c)

    return out.reshape(B, C, H, W)


def se_layer_ref(x, w1, b1, w2, b2):
    y = jnp.mean(x.astype(jnp.float32), axis=(2, 3))   # (B, C)
    h = jnp.maximum(y @ w1.T + b1, 0.0)                # (B, hidden)
    z = h @ w2.T + b2                                   # (B, C)
    s = 1.0 / (1.0 + jnp.exp(-z))
    return x * s[:, :, None, None].astype(x.dtype)


if __name__ == "__main__":
    B, C, H, W = 2, 32, 12, 12      # HW = 144: deliberately not a multiple of 128
    reduction = 8
    hidden = C // reduction

    key = jax.random.PRNGKey(0)
    kx, k1, k2, k3, k4 = jax.random.split(key, 5)

    x = jax.random.normal(kx, (B, C, H, W), dtype=jnp.float32)
    # PyTorch nn.Linear layout: weight (out, in), bias (out,)
    w1 = jax.random.normal(k1, (hidden, C), dtype=jnp.float32) * 0.1
    b1 = jax.random.normal(k2, (hidden,), dtype=jnp.float32) * 0.1
    w2 = jax.random.normal(k3, (C, hidden), dtype=jnp.float32) * 0.1
    b2 = jax.random.normal(k4, (C,), dtype=jnp.float32) * 0.1

    out = jax.block_until_ready(se_layer(x, w1, b1, w2, b2))
    ref = se_layer_ref(x, w1, b1, w2, b2)

    assert out.shape == (B, C, H, W)
    # Tolerance loosened slightly for the EUP approximate reciprocal in the
    # sigmoid (~1e-4 relative on a 0..1 gate).
    assert jnp.allclose(out, ref, atol=5e-3, rtol=5e-3), float(jnp.max(jnp.abs(out - ref)))

    print("KERNEL_OK")
</pallas_src>

<mosaic_0001>
module attributes {stable_mosaic.version = 11 : i64} {
  func.func @se_kernel(%arg0: i32, %arg1: memref<2x32x144xf32, #tpu.memory_space<vmem>>, %arg2: memref<4x32xf32, #tpu.memory_space<vmem>>, %arg3: memref<4x1xf32, #tpu.memory_space<vmem>>, %arg4: memref<32x4xf32, #tpu.memory_space<vmem>>, %arg5: memref<32x1xf32, #tpu.memory_space<vmem>>, %arg6: memref<2x32x144xf32, #tpu.memory_space<vmem>>) attributes {dimension_semantics = [#tpu.dimension_semantics<parallel>], iteration_bounds = array<i64: 1>, scalar_prefetch = 0 : i64, scratch_operands = 0 : i64, tpu.core_type = #tpu.core_type<tc>, window_params = [{transform_indices = @transform_0, window_bounds = array<i64: 2, 32, 144>}, {pipeline_mode = #tpu.pipeline_mode<synchronous>, transform_indices = @transform_1, window_bounds = array<i64: 4, 32>}, {pipeline_mode = #tpu.pipeline_mode<synchronous>, transform_indices = @transform_2, window_bounds = array<i64: 4, 1>}, {pipeline_mode = #tpu.pipeline_mode<synchronous>, transform_indices = @transform_3, window_bounds = array<i64: 32, 4>}, {pipeline_mode = #tpu.pipeline_mode<synchronous>, transform_indices = @transform_4, window_bounds = array<i64: 32, 1>}, {transform_indices = @transform_5, window_bounds = array<i64: 2, 32, 144>}]} {
    %c0 = arith.constant 0 : index
    %c0_0 = arith.constant 0 : index
    %c0_1 = arith.constant 0 : index
    %0 = vector.load %arg1[%c0, %c0_0, %c0_1] : memref<2x32x144xf32, #tpu.memory_space<vmem>>, vector<1x32x144xf32>
    %1 = vector.shape_cast %0 : vector<1x32x144xf32> to vector<32x144xf32>
    %cst = arith.constant dense<0.000000e+00> : vector<32xf32>
    %2 = vector.multi_reduction <add>, %1, %cst [1] : vector<32x144xf32> to vector<32xf32>
    %3 = vector.shape_cast %2 : vector<32xf32> to vector<32x1xf32>
    %c1 = arith.constant 1 : index
    %c0_2 = arith.constant 0 : index
    %c0_3 = arith.constant 0 : index
    %4 = vector.load %arg1[%c1, %c0_2, %c0_3] : memref<2x32x144xf32, #tpu.memory_space<vmem>>, vector<1x32x144xf32>
    %5 = vector.shape_cast %4 : vector<1x32x144xf32> to vector<32x144xf32>
    %cst_4 = arith.constant dense<0.000000e+00> : vector<32xf32>
    %6 = vector.multi_reduction <add>, %5, %cst_4 [1] : vector<32x144xf32> to vector<32xf32>
    %7 = vector.shape_cast %6 : vector<32xf32> to vector<32x1xf32>
    %8 = tpu.concatenate %3, %7 in 1 : vector<32x1xf32>, vector<32x1xf32> -> vector<32x2xf32>
    %cst_5 = arith.constant 0.0069444445 : f32
    %9 = vector.broadcast %cst_5 : f32 to vector<32x2xf32>
    %10 = arith.mulf %8, %9 : vector<32x2xf32>
    %c0_6 = arith.constant 0 : index
    %c0_7 = arith.constant 0 : index
    %11 = vector.load %arg2[%c0_6, %c0_7] : memref<4x32xf32, #tpu.memory_space<vmem>>, vector<4x32xf32>
    %cst_8 = arith.constant dense<0.000000e+00> : vector<4x2xf32>
    %12 = tpu.matmul %11, %10, %cst_8 {dimension_numbers = #tpu.dot_dimension_numbers<[1], [0], [0], [1], [0, 0, 1, 1], [], []>} : vector<4x32xf32>, vector<32x2xf32>, vector<4x2xf32> -> vector<4x2xf32>
    %c0_9 = arith.constant 0 : index
    %c0_10 = arith.constant 0 : index
    %13 = vector.load %arg3[%c0_9, %c0_10] : memref<4x1xf32, #tpu.memory_space<vmem>>, vector<4x1xf32>
    %14 = vector.broadcast %13 : vector<4x1xf32> to vector<4x2xf32>
    %15 = arith.addf %12, %14 : vector<4x2xf32>
    %cst_11 = arith.constant 0.000000e+00 : f32
    %16 = vector.broadcast %cst_11 : f32 to vector<4x2xf32>
    %17 = arith.maximumf %15, %16 : vector<4x2xf32>
    %c0_12 = arith.constant 0 : index
    %c0_13 = arith.constant 0 : index
    %18 = vector.load %arg4[%c0_12, %c0_13] : memref<32x4xf32, #tpu.memory_space<vmem>>, vector<32x4xf32>
    %cst_14 = arith.constant dense<0.000000e+00> : vector<32x2xf32>
    %19 = tpu.matmul %18, %17, %cst_14 {dimension_numbers = #tpu.dot_dimension_numbers<[1], [0], [0], [1], [0, 0, 1, 1], [], []>} : vector<32x4xf32>, vector<4x2xf32>, vector<32x2xf32> -> vector<32x2xf32>
    %c0_15 = arith.constant 0 : index
    %c0_16 = arith.constant 0 : index
    %20 = vector.load %arg5[%c0_15, %c0_16] : memref<32x1xf32, #tpu.memory_space<vmem>>, vector<32x1xf32>
    %21 = vector.broadcast %20 : vector<32x1xf32> to vector<32x2xf32>
    %22 = arith.addf %19, %21 : vector<32x2xf32>
    %cst_17 = arith.constant 0.000000e+00 : f32
    %23 = vector.broadcast %cst_17 : f32 to vector<32x2xf32>
    %24 = arith.subf %23, %22 : vector<32x2xf32>
    %25 = math.exp %24 : vector<32x2xf32>
    %cst_18 = arith.constant 1.000000e+00 : f32
    %26 = vector.broadcast %cst_18 : f32 to vector<32x2xf32>
    %27 = arith.addf %26, %25 : vector<32x2xf32>
    %28 = tpu.reciprocal %27 {approx = true} : vector<32x2xf32> -> vector<32x2xf32>
    %c0_19 = arith.constant 0 : index
    %c0_20 = arith.constant 0 : index
    %c0_21 = arith.constant 0 : index
    %29 = vector.load %arg1[%c0_19, %c0_20, %c0_21] : memref<2x32x144xf32, #tpu.memory_space<vmem>>, vector<1x32x144xf32>
    %30 = vector.shape_cast %29 : vector<1x32x144xf32> to vector<32x144xf32>
    %31 = vector.extract_strided_slice %28 {offsets = [0, 0], sizes = [32, 1], strides = [1, 1]} : vector<32x2xf32> to vector<32x1xf32>
    %32 = vector.broadcast %31 : vector<32x1xf32> to vector<32x144xf32>
    %33 = arith.mulf %30, %32 : vector<32x144xf32>
    %c0_22 = arith.constant 0 : index
    %c0_23 = arith.constant 0 : index
    %c0_24 = arith.constant 0 : index
    %34 = vector.load %arg6[%c0_22, %c0_23, %c0_24] : memref<2x32x144xf32, #tpu.memory_space<vmem>>, vector<1x32x144xf32>
    %35 = vector.shape_cast %34 : vector<1x32x144xf32> to vector<32x144xf32>
    %36 = vector.shape_cast %33 : vector<32x144xf32> to vector<1x32x144xf32>
    tpu.vector_store %arg6[%c0_22, %c0_23, %c0_24], %36 {strides = array<i32>} : memref<2x32x144xf32, #tpu.memory_space<vmem>>, vector<1x32x144xf32>,
    %c1_25 = arith.constant 1 : index
    %c0_26 = arith.constant 0 : index
    %c0_27 = arith.constant 0 : index
    %37 = vector.load %arg1[%c1_25, %c0_26, %c0_27] : memref<2x32x144xf32, #tpu.memory_space<vmem>>, vector<1x32x144xf32>
    %38 = vector.shape_cast %37 : vector<1x32x144xf32> to vector<32x144xf32>
    %39 = vector.extract_strided_slice %28 {offsets = [0, 1], sizes = [32, 1], strides = [1, 1]} : vector<32x2xf32> to vector<32x1xf32>
    %40 = vector.broadcast %39 : vector<32x1xf32> to vector<32x144xf32>
    %41 = arith.mulf %38, %40 : vector<32x144xf32>
    %c1_28 = arith.constant 1 : index
    %c0_29 = arith.constant 0 : index
    %c0_30 = arith.constant 0 : index
    %42 = vector.load %arg6[%c1_28, %c0_29, %c0_30] : memref<2x32x144xf32, #tpu.memory_space<vmem>>, vector<1x32x144xf32>
    %43 = vector.shape_cast %42 : vector<1x32x144xf32> to vector<32x144xf32>
    %44 = vector.shape_cast %41 : vector<32x144xf32> to vector<1x32x144xf32>
    tpu.vector_store %arg6[%c1_28, %c0_29, %c0_30], %44 {strides = array<i32>} : memref<2x32x144xf32, #tpu.memory_space<vmem>>, vector<1x32x144xf32>,
    return
  }
  func.func @transform_0(%arg0: i32) -> (i32, i32, i32) {
    %c0_i32 = arith.constant 0 : i32
    %c0_i32_0 = arith.constant 0 : i32
    %c0_i32_1 = arith.constant 0 : i32
    return %arg0, %c0_i32, %c0_i32_0 : i32, i32, i32
  }
  func.func @transform_1(%arg0: i32) -> (i32, i32) {
    %c0_i32 = arith.constant 0 : i32
    %c0_i32_0 = arith.constant 0 : i32
    %c0_i32_1 = arith.constant 0 : i32
    return %c0_i32, %c0_i32_0 : i32, i32
  }
  func.func @transform_2(%arg0: i32) -> (i32, i32) {
    %c0_i32 = arith.constant 0 : i32
    %c0_i32_0 = arith.constant 0 : i32
    %c0_i32_1 = arith.constant 0 : i32
    return %c0_i32, %c0_i32_0 : i32, i32
  }
  func.func @transform_3(%arg0: i32) -> (i32, i32) {
    %c0_i32 = arith.constant 0 : i32
    %c0_i32_0 = arith.constant 0 : i32
    %c0_i32_1 = arith.constant 0 : i32
    return %c0_i32, %c0_i32_0 : i32, i32
  }
  func.func @transform_4(%arg0: i32) -> (i32, i32) {
    %c0_i32 = arith.constant 0 : i32
    %c0_i32_0 = arith.constant 0 : i32
    %c0_i32_1 = arith.constant 0 : i32
    return %c0_i32, %c0_i32_0 : i32, i32
  }
  func.func @transform_5(%arg0: i32) -> (i32, i32, i32) {
    %c0_i32 = arith.constant 0 : i32
    %c0_i32_0 = arith.constant 0 : i32
    %c0_i32_1 = arith.constant 0 : i32
    return %arg0, %c0_i32, %c0_i32_0 : i32, i32, i32
  }
}

</mosaic_0001>

<llo_original>
// kernel: tpu_custom_call.1
$region0: #{tpu_custom_call.1}
  #allocation0 [shape = 'u32[]', space=smem, size = 0x4, offset = 0x4, fixed_abs, tag = 'smem constant byte address 0x4 - core index']
  #allocation1 [shape = 'u32[144,128]{1,0:T(1,128)}', space=vmem, size = 0x12000, scoped, tag = 'internal scratch']
  %s0 = inlined_call_operand.hbm [shape: f32[2,32,144], index: 0, kind: input, shape index: {}]
  %s1 = inlined_call_operand.hbm [shape: f32[4,32], index: 1, kind: input, shape index: {}]
  %s2 = inlined_call_operand.hbm [shape: f32[4,1], index: 2, kind: input, shape index: {}]
  %s3 = inlined_call_operand.hbm [shape: f32[32,4], index: 3, kind: input, shape index: {}]
  %s4 = inlined_call_operand.hbm [shape: f32[32,1], index: 4, kind: input, shape index: {}]
  %s5 = inlined_call_operand.hbm [shape: f32[2,32,144], index: 5, kind: output, shape index: {}]
  %s6 = sld [smem:[#allocation0]]
  $region50: #{tpu_custom_call.1} parent=0
    _
  %s8 = ssub.s32 1, %s6
  %s9 = scalar_select 0, %s8, %s6
  $region1: #{tpu_custom_call.1} parent=0
    #allocation2 [shape = 'u8[65536]{0}', space=vmem, size = 0x10000, scoped, tag = 'input window, operand 0, single buffered']
    #allocation3 [shape = 's32[1]{0}', space=sflag, size = 0x4, scoped, tag = 'scoped memory for tpu_custom_call.1']
    #allocation4 [shape = 's32[1]{0}', space=sflag, size = 0x4, scoped, tag = 'scoped memory for tpu_custom_call.1']
    #allocation5 [shape = 'u8[2048]{0}', space=vmem, size = 0x800, scoped, tag = 'input window, operand 1, single buffered']
    #allocation6 [shape = 's32[1]{0}', space=sflag, size = 0x4, scoped, tag = 'scoped memory for tpu_custom_call.1']
    #allocation7 [shape = 'u8[2048]{0}', space=vmem, size = 0x800, scoped, tag = 'input window, operand 2, single buffered']
    #allocation8 [shape = 'u8[16384]{0}', space=vmem, size = 0x4000, scoped, tag = 'input window, operand 3, single buffered']
    #allocation9 [shape = 's32[1]{0}', space=sflag, size = 0x4, scoped, tag = 'scoped memory for tpu_custom_call.1']
    #allocation10 [shape = 'u8[16384]{0}', space=vmem, size = 0x4000, scoped, tag = 'input window, operand 4, single buffered']
    #allocation11 [shape = 'u8[65536]{0}', space=vmem, size = 0x10000, scoped, tag = 'output window, operand 0, single buffered']
    %10 = vsyncpa [#allocation3], 0
    %11 = vsyncpa [#allocation6], 0
    %12 = vsyncpa [#allocation9], 0
    %13 = vsyncpa [#allocation4], 0
    // Predicated region
    $region2: #{tpu_custom_call.1} parent=1 // pred_check
      _
    $region3: #{tpu_custom_call.1} parent=1 // pred_check_branch
      %15 = sbr.rel (0) target = $region5
    $region4: #{tpu_custom_call.1} parent=1 // pred_region
      %s17 = ssub.s32 2048, 2048
      %18 = vsyncadd [#allocation3], %s17
      %s19 = sshll.u32 [#allocation2], 4
      %s20 = int_to_ptr.vmem [resolvable:$true] %s19
      %25 = dma.hbm_to_vmem [thread:$0]  %s0, 2048, %s20, [#allocation3], 256, 256, 16
    $region5: #{tpu_custom_call.1} parent=1 // pred_fallthru
      _
    // Predicated region
    $region6: #{tpu_custom_call.1} parent=1 // pred_check
      _
    $region7: #{tpu_custom_call.1} parent=1 // pred_check_branch
      %27 = sbr.rel (0) target = $region9
    $region8: #{tpu_custom_call.1} parent=1 // pred_region
      %s29 = ssub.s32 64, 64
      %30 = vsyncadd [#allocation6], %s29
      %s32 = sshll.u32 [#allocation5], 4
      %s33 = int_to_ptr.vmem [resolvable:$true] %s32
      %35 = dma.hbm_to_vmem [thread:$0]  %s1, 64, %s33, [#allocation6]
    $region9: #{tpu_custom_call.1} parent=1 // pred_fallthru
      _
    // Predicated region
    $region10: #{tpu_custom_call.1} parent=1 // pred_check
      _
    $region11: #{tpu_custom_call.1} parent=1 // pred_check_branch
      %37 = sbr.rel (0) target = $region13
    $region12: #{tpu_custom_call.1} parent=1 // pred_region
      %s39 = ssub.s32 64, 64
      %40 = vsyncadd [#allocation6], %s39
      %s42 = sshll.u32 [#allocation7], 4
      %s43 = int_to_ptr.vmem [resolvable:$true] %s42
      %45 = dma.hbm_to_vmem [thread:$0]  %s2, 64, %s43, [#allocation6]
    $region13: #{tpu_custom_call.1} parent=1 // pred_fallthru
      _
    // Predicated region
    $region14: #{tpu_custom_call.1} parent=1 // pred_check
      _
    $region15: #{tpu_custom_call.1} parent=1 // pred_check_branch
      %47 = sbr.rel (0) target = $region17
    $region16: #{tpu_custom_call.1} parent=1 // pred_region
      %s49 = ssub.s32 512, 512
      %50 = vsyncadd [#allocation9], %s49
      %s51 = sshll.u32 [#allocation8], 4
      %s52 = int_to_ptr.vmem [resolvable:$true] %s51
      %57 = dma.hbm_to_vmem [thread:$0]  %s3, 512, %s52, [#allocation9], 128, 128, 8
    $region17: #{tpu_custom_call.1} parent=1 // pred_fallthru
      _
    // Predicated region
    $region18: #{tpu_custom_call.1} parent=1 // pred_check
      _
    $region19: #{tpu_custom_call.1} parent=1 // pred_check_branch
      %59 = sbr.rel (0) target = $region21
    $region20: #{tpu_custom_call.1} parent=1 // pred_region
      %s61 = ssub.s32 512, 512
      %62 = vsyncadd [#allocation9], %s61
      %s63 = sshll.u32 [#allocation10], 4
      %s64 = int_to_ptr.vmem [resolvable:$true] %s63
      %69 = dma.hbm_to_vmem [thread:$0]  %s4, 512, %s64, [#allocation9], 128, 128, 8
    $region21: #{tpu_custom_call.1} parent=1 // pred_fallthru
      _
    // Predicated region
    $region22: #{tpu_custom_call.1} parent=1 // pred_check
      _
    $region23: #{tpu_custom_call.1} parent=1 // pred_check_branch
      %71 = sbr.rel (0) target = $region25
    $region24: #{tpu_custom_call.1} parent=1 // pred_region
      %72 = dma.done [#allocation3], 2048
    $region25: #{tpu_custom_call.1} parent=1 // pred_fallthru
      _
    // Predicated region
    $region26: #{tpu_custom_call.1} parent=1 // pred_check
      _
    $region27: #{tpu_custom_call.1} parent=1 // pred_check_branch
      %74 = sbr.rel (0) target = $region29
    $region28: #{tpu_custom_call.1} parent=1 // pred_region
      %75 = dma.done [#allocation6], 64
    $region29: #{tpu_custom_call.1} parent=1 // pred_fallthru
      _
    // Predicated region
    $region30: #{tpu_custom_call.1} parent=1 // pred_check
      _
    $region31: #{tpu_custom_call.1} parent=1 // pred_check_branch
      %77 = sbr.rel (0) target = $region33
    $region32: #{tpu_custom_call.1} parent=1 // pred_region
      %78 = dma.done [#allocation6], 64
    $region33: #{tpu_custom_call.1} parent=1 // pred_fallthru
      _
    // Predicated region
    $region34: #{tpu_custom_call.1} parent=1 // pred_check
      _
    $region35: #{tpu_custom_call.1} parent=1 // pred_check_branch
      %80 = sbr.rel (0) target = $region37
    $region36: #{tpu_custom_call.1} parent=1 // pred_region
      %81 = dma.done [#allocation9], 512
    $region37: #{tpu_custom_call.1} parent=1 // pred_fallthru
      _
    // Predicated region
    $region38: #{tpu_custom_call.1} parent=1 // pred_check
      _
    $region39: #{tpu_custom_call.1} parent=1 // pred_check_branch
      %83 = sbr.rel (0) target = $region41
    $region40: #{tpu_custom_call.1} parent=1 // pred_region
      %84 = dma.done [#allocation9], 512
    $region41: #{tpu_custom_call.1} parent=1 // pred_fallthru
      _
    %v85 = vld [vmem:[#allocation2] sm:$0xff]
    %v86 = vld [vmem:[#allocation2 + $0x8] sm:$0xff]
    %v87 = vld [vmem:[#allocation2 + $0x10] sm:$0xff]
    %v88 = vld [vmem:[#allocation2 + $0x18] sm:$0xff]
    %v89 = vld [vmem:[#allocation2 + $0x20] sm:$0xff]
    %v90 = vld [vmem:[#allocation2 + $0x28] sm:$0xff]
    %v91 = vld [vmem:[#allocation2 + $0x30] sm:$0xff]
    %v92 = vld [vmem:[#allocation2 + $0x38] sm:$0xff]
    %vm93 = vcmask 130048
    %v94 = vsel %vm93, %v86, 0.0
    %v95 = vadd.f32 %v85, %v94
    %96 = vadd.xlane.f32.xlu0 %v95
    %v97 = vpop.xlane.xlu0 %96
    %v98 = vsel %vm93, %v88, 0.0
    %v99 = vadd.f32 %v87, %v98
    %100 = vadd.xlane.f32.xlu0 %v99
    %v101 = vpop.xlane.xlu0 %100
    %v102 = vsel %vm93, %v90, 0.0
    %v103 = vadd.f32 %v89, %v102
    %104 = vadd.xlane.f32.xlu0 %v103
    %v105 = vpop.xlane.xlu0 %104
    %v106 = vsel %vm93, %v92, 0.0
    %v107 = vadd.f32 %v91, %v106
    %108 = vadd.xlane.f32.xlu0 %v107
    %v109 = vpop.xlane.xlu0 %108
    %s110 = scalar_lea.vmem [#allocation2], 64
    %v111 = vld [vmem:[%s110] sm:$0xff]
    %v112 = vld [vmem:[%s110 + $0x8] sm:$0xff]
    %v113 = vld [vmem:[%s110 + $0x10] sm:$0xff]
    %v114 = vld [vmem:[%s110 + $0x18] sm:$0xff]
    %v115 = vld [vmem:[%s110 + $0x20] sm:$0xff]
    %v116 = vld [vmem:[%s110 + $0x28] sm:$0xff]
    %v117 = vld [vmem:[%s110 + $0x30] sm:$0xff]
    %v118 = vld [vmem:[%s110 + $0x38] sm:$0xff]
    %v119 = vsel %vm93, %v112, 0.0
    %v120 = vadd.f32 %v111, %v119
    %121 = vadd.xlane.f32.xlu0 %v120
    %v122 = vpop.xlane.xlu0 %121
    %v123 = vsel %vm93, %v114, 0.0
    %v124 = vadd.f32 %v113, %v123
    %125 = vadd.xlane.f32.xlu0 %v124
    %v126 = vpop.xlane.xlu0 %125
    %v127 = vsel %vm93, %v116, 0.0
    %v128 = vadd.f32 %v115, %v127
    %129 = vadd.xlane.f32.xlu0 %v128
    %v130 = vpop.xlane.xlu0 %129
    %v131 = vsel %vm93, %v118, 0.0
    %v132 = vadd.f32 %v117, %v131
    %133 = vadd.xlane.f32.xlu0 %v132
    %v134 = vpop.xlane.xlu0 %133
    %vm135 = vcmask 7168
    %v136 = vsel %vm135, %v97, %v122
    %v137 = vsel %vm135, %v101, %v126
    %v138 = vsel %vm135, %v105, %v130
    %v139 = vsel %vm135, %v109, %v134
    %v140 = vmul.f32 %v136, 0.0069444445
    %v141 = vmul.f32 %v137, 0.0069444445
    %v142 = vmul.f32 %v138, 0.0069444445
    %v143 = vmul.f32 %v139, 0.0069444445
    %v144 = vld [vmem:[#allocation5] sm:$0xf]
    %v145 = vld [vmem:[#allocation7] sm:$0xf]
    %147 = vset.pattern.permute.xlu0 0
    %148 = vperm.xlu0 %147, %v145
    %v149 = vpop.permute.xlu0 %148
    %vm151 = vcmask 261120
    %v153 = vsel %vm151, %v144, 0
    %155 = vmatprep.subr.mxu0 0.0
    %156 = vmatpush1.msra.mxu0 %v140
    %157 = vmatprep.subr.mxu0 0.0
    %158 = vmatpush1.msra.mxu0 %v141
    %159 = vmatprep.subr.mxu0 0.0
    %160 = vmatpush1.msra.mxu0 %v142
    %161 = vmatprep.subr.mxu0 0.0
    %162 = vmatpush1.msra.mxu0 %v143
    %163 = vmatprep.subr.mxu0 0.0
    %164 = vmatpush1.msra.mxu0 0.0
    %165 = vmatprep.subr.mxu0 0.0
    %166 = vmatpush1.msra.mxu0 0.0
    %167 = vmatprep.subr.mxu0 0.0
    %168 = vmatpush1.msra.mxu0 0.0
    %169 = vmatprep.subr.mxu0 0.0
    %170 = vmatpush1.msra.mxu0 0.0
    %171 = vmatprep.subr.mxu0 0.0
    %172 = vmatpush1.msra.mxu0 0.0
    %173 = vmatprep.subr.mxu0 0.0
    %174 = vmatpush1.msra.mxu0 0.0
    %175 = vmatprep.subr.mxu0 0.0
    %176 = vmatpush1.msra.mxu0 0.0
    %177 = vmatprep.subr.mxu0 0.0
    %178 = vmatpush1.msra.mxu0 0.0
    %179 = vmatprep.subr.mxu0 0.0
    %180 = vmatpush1.msra.mxu0 0.0
    %181 = vmatprep.subr.mxu0 0.0
    %182 = vmatpush1.msra.mxu0 0.0
    %183 = vmatprep.subr.mxu0 0.0
    %184 = vmatpush1.msra.mxu0 0.0
    %185 = vmatprep.subr.mxu0 0.0
    %186 = vmatpush1.msra.mxu0 0.0
    %187 = vmatprep.subr.mxu0 0.0
    %188 = vmatpush1.msra.mxu0 0.0
    %189 = vmatprep.subr.mxu0 0.0
    %190 = vmatpush1.msra.mxu0 0.0
    %191 = vmatprep.subr.mxu0 0.0
    %192 = vmatpush1.msra.mxu0 0.0
    %193 = vmatprep.subr.mxu0 0.0
    %194 = vmatpush1.msra.mxu0 0.0
    %195 = vmatprep.subr.mxu0 0.0
    %196 = vmatpush1.msra.mxu0 0.0
    %197 = vmatprep.subr.mxu0 0.0
    %198 = vmatpush1.msra.mxu0 0.0
    %199 = vmatprep.subr.mxu0 0.0
    %200 = vmatpush1.msra.mxu0 0.0
    %201 = vmatprep.subr.mxu0 0.0
    %202 = vmatpush1.msra.mxu0 0.0
    %203 = vmatprep.subr.mxu0 0.0
    %204 = vmatpush1.msra.mxu0 0.0
    %205 = vmatprep.subr.mxu0 0.0
    %206 = vmatpush1.msra.mxu0 0.0
    %207 = vmatprep.subr.mxu0 0.0
    %208 = vmatpush1.msra.mxu0 0.0
    %209 = vmatprep.subr.mxu0 0.0
    %210 = vmatpush1.msra.mxu0 0.0
    %211 = vmatprep.subr.mxu0 0.0
    %212 = vmatpush1.msra.mxu0 0.0
    %213 = vmatprep.subr.mxu0 0.0
    %214 = vmatpush1.msra.mxu0 0.0
    %215 = vmatprep.subr.mxu0 0.0
    %216 = vmatpush1.msra.mxu0 0.0
    %217 = vmatprep.subr.mxu0 0.0
    %218 = vmatpush1.msra.mxu0 0.0
    %219 = vmatprep.mubr.f32.mxu0 0.0
    %220 = vmatmul.mubr.f32.gmra.mrb[0].mxu0 %v153
    %v221 = vpop.f32.mrb[0].mxu0
    %v222 = vadd.f32 %v149, %v221
    %v223 = vpop.f32.mrb[0].mxu0
    %224 = vdwg.mxu0
    %v225 = vmax.f32 %v222, 0.0
    %v226 = vld [vmem:[#allocation8] sm:$0xff]
    %v227 = vld [vmem:[#allocation8 + $0x8] sm:$0xff]
    %v228 = vld [vmem:[#allocation8 + $0x10] sm:$0xff]
    %v229 = vld [vmem:[#allocation8 + $0x18] sm:$0xff]
    %v230 = vld [vmem:[#allocation10] sm:$0xff]
    %v231 = vld [vmem:[#allocation10 + $0x8] sm:$0xff]
    %v232 = vld [vmem:[#allocation10 + $0x10] sm:$0xff]
    %v233 = vld [vmem:[#allocation10 + $0x18] sm:$0xff]
    %235 = vset.pattern.permute.xlu0 0
    %236 = vperm.xlu0 %235, %v230
    %v237 = vpop.permute.xlu0 %236
    %240 = vset.pattern.permute.xlu0 0
    %241 = vperm.xlu0 %240, %v231
    %v242 = vpop.permute.xlu0 %241
    %245 = vset.pattern.permute.xlu0 0
    %246 = vperm.xlu0 %245, %v232
    %v247 = vpop.permute.xlu0 %246
    %250 = vset.pattern.permute.xlu0 0
    %251 = vperm.xlu0 %250, %v233
    %v252 = vpop.permute.xlu0 %251
    %vm254 = vcmask 31744
    %v256 = vsel %vm254, %v226, 0
    %v259 = vsel %vm254, %v227, 0
    %v262 = vsel %vm254, %v228, 0
    %v265 = vsel %vm254, %v229, 0
    %vm267 = vcmask 1043456
    %v269 = vsel %vm267, %v225, 0
    %271 = vmatprep.subr.mxu0 0.0
    %272 = vmatpush1.msra.mxu0 %v269
    %273 = vmatprep.subr.mxu0 0.0
    %274 = vmatpush1.msra.mxu0 0.0
    %275 = vmatprep.subr.mxu0 0.0
    %276 = vmatpush1.msra.mxu0 0.0
    %277 = vmatprep.subr.mxu0 0.0
    %278 = vmatpush1.msra.mxu0 0.0
    %279 = vmatprep.subr.mxu0 0.0
    %280 = vmatpush1.msra.mxu0 0.0
    %281 = vmatprep.subr.mxu0 0.0
    %282 = vmatpush1.msra.mxu0 0.0
    %283 = vmatprep.subr.mxu0 0.0
    %284 = vmatpush1.msra.mxu0 0.0
    %285 = vmatprep.subr.mxu0 0.0
    %286 = vmatpush1.msra.mxu0 0.0
    %287 = vmatprep.subr.mxu0 0.0
    %288 = vmatpush1.msra.mxu0 0.0
    %289 = vmatprep.subr.mxu0 0.0
    %290 = vmatpush1.msra.mxu0 0.0
    %291 = vmatprep.subr.mxu0 0.0
    %292 = vmatpush1.msra.mxu0 0.0
    %293 = vmatprep.subr.mxu0 0.0
    %294 = vmatpush1.msra.mxu0 0.0
    %295 = vmatprep.subr.mxu0 0.0
    %296 = vmatpush1.msra.mxu0 0.0
    %297 = vmatprep.subr.mxu0 0.0
    %298 = vmatpush1.msra.mxu0 0.0
    %299 = vmatprep.subr.mxu0 0.0
    %300 = vmatpush1.msra.mxu0 0.0
    %301 = vmatprep.subr.mxu0 0.0
    %302 = vmatpush1.msra.mxu0 0.0
    %303 = vmatprep.subr.mxu0 0.0
    %304 = vmatpush1.msra.mxu0 0.0
    %305 = vmatprep.subr.mxu0 0.0
    %306 = vmatpush1.msra.mxu0 0.0
    %307 = vmatprep.subr.mxu0 0.0
    %308 = vmatpush1.msra.mxu0 0.0
    %309 = vmatprep.subr.mxu0 0.0
    %310 = vmatpush1.msra.mxu0 0.0
    %311 = vmatprep.subr.mxu0 0.0
    %312 = vmatpush1.msra.mxu0 0.0
    %313 = vmatprep.subr.mxu0 0.0
    %314 = vmatpush1.msra.mxu0 0.0
    %315 = vmatprep.subr.mxu0 0.0
    %316 = vmatpush1.msra.mxu0 0.0
    %317 = vmatprep.subr.mxu0 0.0
    %318 = vmatpush1.msra.mxu0 0.0
    %319 = vmatprep.subr.mxu0 0.0
    %320 = vmatpush1.msra.mxu0 0.0
    %321 = vmatprep.subr.mxu0 0.0
    %322 = vmatpush1.msra.mxu0 0.0
    %323 = vmatprep.subr.mxu0 0.0
    %324 = vmatpush1.msra.mxu0 0.0
    %325 = vmatprep.subr.mxu0 0.0
    %326 = vmatpush1.msra.mxu0 0.0
    %327 = vmatprep.subr.mxu0 0.0
    %328 = vmatpush1.msra.mxu0 0.0
    %329 = vmatprep.subr.mxu0 0.0
    %330 = vmatpush1.msra.mxu0 0.0
    %331 = vmatprep.subr.mxu0 0.0
    %332 = vmatpush1.msra.mxu0 0.0
    %333 = vmatprep.subr.mxu0 0.0
    %334 = vmatpush1.msra.mxu0 0.0
    %335 = vmatprep.mubr.f32.mxu0 0.0
    %336 = vmatmul.mubr.f32.gmra.mrb[0].mxu0 %v256
    %v337 = vpop.f32.mrb[0].mxu0
    %v338 = vadd.f32 %v237, %v337
    %v339 = vpop.f32.mrb[0].mxu0
    %340 = vmatprep.mubr.f32.mxu0 0.0
    %341 = vmatmul.mubr.f32.gmra.mrb[0].mxu0 %v259
    %v342 = vpop.f32.mrb[0].mxu0
    %v343 = vadd.f32 %v242, %v342
    %v344 = vpop.f32.mrb[0].mxu0
    %345 = vmatprep.mubr.f32.mxu0 0.0
    %346 = vmatmul.mubr.f32.gmra.mrb[0].mxu0 %v262
    %v347 = vpop.f32.mrb[0].mxu0
    %v348 = vadd.f32 %v247, %v347
    %v349 = vpop.f32.mrb[0].mxu0
    %350 = vmatprep.mubr.f32.mxu0 0.0
    %351 = vmatmul.mubr.f32.gmra.mrb[0].mxu0 %v265
    %v352 = vpop.f32.mrb[0].mxu0
    %v353 = vadd.f32 %v252, %v352
    %v354 = vpop.f32.mrb[0].mxu0
    %355 = vdwg.mxu0
    %v356 = vsub.f32 0.0, %v338
    %v357 = vsub.f32 0.0, %v343
    %v358 = vsub.f32 0.0, %v348
    %v359 = vsub.f32 0.0, %v353
    %v360 = vmul.f32 %v356, 1.442695
    %v361 = vpow.pop %v360
    %v362 = vmul.f32 %v357, 1.442695
    %v363 = vpow.pop %v362
    %v364 = vmul.f32 %v358, 1.442695
    %v365 = vpow.pop %v364
    %v366 = vmul.f32 %v359, 1.442695
    %v367 = vpow.pop %v366
    %v368 = vadd.f32 %v361, 1.0
    %v369 = vadd.f32 %v363, 1.0
    %v370 = vadd.f32 %v365, 1.0
    %v371 = vadd.f32 %v367, 1.0
    %v372 = vrcp.pop %v368
    %v373 = vrcp.pop %v369
    %v374 = vrcp.pop %v370
    %v375 = vrcp.pop %v371
    %377 = vset.pattern.permute.xlu0 0
    %378 = vperm.xlu0 %377, %v372
    %v379 = vpop.permute.xlu0 %378
    %382 = vset.pattern.permute.xlu0 0
    %383 = vperm.xlu0 %382, %v373
    %v384 = vpop.permute.xlu0 %383
    %387 = vset.pattern.permute.xlu0 0
    %388 = vperm.xlu0 %387, %v374
    %v389 = vpop.permute.xlu0 %388
    %392 = vset.pattern.permute.xlu0 0
    %393 = vperm.xlu0 %392, %v375
    %v394 = vpop.permute.xlu0 %393
    %v396 = vmul.f32 %v85, %v379
    %v397 = vmul.f32 %v86, %v379
    %v398 = vmul.f32 %v87, %v384
    %v399 = vmul.f32 %v88, %v384
    %v400 = vmul.f32 %v89, %v389
    %v401 = vmul.f32 %v90, %v389
    %v402 = vmul.f32 %v91, %v394
    %v403 = vmul.f32 %v92, %v394
    %404 = vst [vmem:[#allocation11] sm:$0xff] %v396
    %405 = vst.msk [vmem:[#allocation11 + $0x8] sm:$0xff] %vm93, %v397
    %406 = vst [vmem:[#allocation11 + $0x10] sm:$0xff] %v398
    %407 = vst.msk [vmem:[#allocation11 + $0x18] sm:$0xff] %vm93, %v399
    %408 = vst [vmem:[#allocation11 + $0x20] sm:$0xff] %v400
    %409 = vst.msk [vmem:[#allocation11 + $0x28] sm:$0xff] %vm93, %v401
    %410 = vst [vmem:[#allocation11 + $0x30] sm:$0xff] %v402
    %411 = vst.msk [vmem:[#allocation11 + $0x38] sm:$0xff] %vm93, %v403
    %v412 = vld [vmem:[%s110] sm:$0xff]
    %v413 = vld [vmem:[%s110 + $0x8] sm:$0xff]
    %v414 = vld [vmem:[%s110 + $0x10] sm:$0xff]
    %v415 = vld [vmem:[%s110 + $0x18] sm:$0xff]
    %v416 = vld [vmem:[%s110 + $0x20] sm:$0xff]
    %v417 = vld [vmem:[%s110 + $0x28] sm:$0xff]
    %v418 = vld [vmem:[%s110 + $0x30] sm:$0xff]
    %v419 = vld [vmem:[%s110 + $0x38] sm:$0xff]
    %420 = vset.pattern.permute.xlu0 1
    %421 = vperm.xlu0 %420, %v372
    %v422 = vpop.permute.xlu0 %421
    %424 = vset.pattern.permute.xlu0 1
    %425 = vperm.xlu0 %424, %v373
    %v426 = vpop.permute.xlu0 %425
    %428 = vset.pattern.permute.xlu0 1
    %429 = vperm.xlu0 %428, %v374
    %v430 = vpop.permute.xlu0 %429
    %432 = vset.pattern.permute.xlu0 1
    %433 = vperm.xlu0 %432, %v375
    %v434 = vpop.permute.xlu0 %433
    %v436 = vmul.f32 %v412, %v422
    %v437 = vmul.f32 %v413, %v422
    %v438 = vmul.f32 %v414, %v426
    %v439 = vmul.f32 %v415, %v426
    %v440 = vmul.f32 %v416, %v430
    %v441 = vmul.f32 %v417, %v430
    %v442 = vmul.f32 %v418, %v434
    %v443 = vmul.f32 %v419, %v434
    %s444 = scalar_lea.vmem [#allocation11], 64
    %445 = vst [vmem:[%s444] sm:$0xff] %v436
    %446 = vst.msk [vmem:[%s444 + $0x8] sm:$0xff] %vm93, %v437
    %447 = vst [vmem:[%s444 + $0x10] sm:$0xff] %v438
    %448 = vst.msk [vmem:[%s444 + $0x18] sm:$0xff] %vm93, %v439
    %449 = vst [vmem:[%s444 + $0x20] sm:$0xff] %v440
    %450 = vst.msk [vmem:[%s444 + $0x28] sm:$0xff] %vm93, %v441
    %451 = vst [vmem:[%s444 + $0x30] sm:$0xff] %v442
    %452 = vst.msk [vmem:[%s444 + $0x38] sm:$0xff] %vm93, %v443
    // Predicated region
    $region42: #{tpu_custom_call.1} parent=1 // pred_check
      _
    $region43: #{tpu_custom_call.1} parent=1 // pred_check_branch
      %454 = sbr.rel (0) target = $region45
    $region44: #{tpu_custom_call.1} parent=1 // pred_region
      %s456 = ssub.s32 2048, 2048
      %457 = vsyncadd [#allocation4], %s456
      %s458 = sshll.u32 [#allocation11], 4
      %s459 = int_to_ptr.vmem [resolvable:$true] %s458
      %464 = dma.vmem_to_hbm [thread:$0]  %s459, 2048, %s5, [#allocation4], 256, 256, 16
    $region45: #{tpu_custom_call.1} parent=1 // pred_fallthru
      _
    // Predicated region
    $region46: #{tpu_custom_call.1} parent=1 // pred_check
      _
    $region47: #{tpu_custom_call.1} parent=1 // pred_check_branch
      %466 = sbr.rel (0) target = $region49
    $region48: #{tpu_custom_call.1} parent=1 // pred_region
      %467 = dma.done [#allocation4], 2048
    $region49: #{tpu_custom_call.1} parent=1 // pred_fallthru
      _
    %468 = vsyncpa [#allocation3], 1
    %469 = vsyncpa [#allocation6], 1
    %470 = vsyncpa [#allocation9], 1
    %471 = vsyncpa [#allocation4], 1

</llo_original>
